<compile_context>
chip_gen: v7x
topology: tpu7x:2x2x1
jax: 0.10.0
libtpu: 0.0.40
codegen_flags: <defaults>
</compile_context>

<pallas_src>
import functools

import jax
import jax.numpy as jnp
from jax.experimental import pallas as pl
from jax.experimental.pallas import tpu as pltpu

LANE = 128          # TPU lane width; hidden feature dims are packed to this
VALUE_LANE = 127    # lane of the fused head output carrying the value
OUT_W = 8           # output lanes: 0 value, 1 action, 2 logp(action), 3 entropy


def _round_up(n, m):
    return ((n + m - 1) // m) * m


def policy_act_kernel(x_ref, w1_ref, w2_ref, wh_ref, b_ref, out_ref, *, n_actions):
    """Fused Policy.act(deterministic=True) for one batch tile.

    x_ref  : (TB, d_in)   f32  observations (un-padded feature dim)
    w1_ref : (d_in, LANE) bf16 [actor_W1 | critic_W1]
    w2_ref : (LANE, LANE) bf16 block-diag(actor_W2, critic_W2)
    wh_ref : (LANE, LANE) f32  heads: cols 0:A dist head (actor half),
                               col VALUE_LANE value head (critic half)
    b_ref  : (8, LANE)    f32  rows 0/1/2 = fused biases of the three matmuls
    out_ref: (TB, OUT_W)  f32  lane 0 value, 1 action, 2 logp(action), 3 entropy
    """
    x16 = x_ref[...].astype(jnp.bfloat16)            # cast in-kernel; no extra XLA op
    b = b_ref[...]                                   # (8, LANE) f32

    # ---- fused actor/critic towers: 3 lane-dense MXU pushes, f32 accumulate ----
    h1 = jnp.tanh(jnp.dot(x16, w1_ref[...],
                          preferred_element_type=jnp.float32) + b[0:1, :])
    h2 = jnp.tanh(jnp.dot(h1.astype(jnp.bfloat16), w2_ref[...],
                          preferred_element_type=jnp.float32) + b[1:2, :])
    head = jnp.dot(h2, wh_ref[...],
                   preferred_element_type=jnp.float32) + b[2:3, :]   # f32 head

    col = jax.lax.broadcasted_iota(jnp.int32, head.shape, 1)
    valid = col < n_actions

    # ---- value head (critic half routed to lane VALUE_LANE) ----
    value = head[:, VALUE_LANE:VALUE_LANE + 1]       # (TB, 1)

    # ---- numerically stable log-softmax pieces (single full-width exp) ----
    masked = jnp.where(valid, head, jnp.float32(-jnp.inf))
    m = jnp.max(masked, axis=-1, keepdims=True)      # (TB, 1)
    zm = jnp.where(valid, head - m, 0.0)             # finite everywhere (no 0*inf NaN)
    ez = jnp.where(valid, jnp.exp(zm), 0.0)
    s = jnp.sum(ez, axis=-1, keepdims=True)          # (TB, 1), >= 1
    lse = jnp.log(s)
    inv_s = pl.reciprocal(s, approx=True)            # EUP, nearly free

    # ---- dist.mode(): first maximal index (matches torch argmax ties) ----
    big = jnp.int32(2 ** 30)
    action = jnp.min(jnp.where(valid & (head == m), col, big),
                     axis=-1, keepdims=True)         # (TB, 1) i32

    # ---- dist.log_probs(action) ----
    alp = jnp.sum(jnp.where(col == action, zm, 0.0), axis=-1, keepdims=True) - lse

    # ---- per-row entropy:  -sum p*logp = lse - sum(ez*zm)/s  (mean done in wrapper) ----
    ent = lse - jnp.sum(ez * zm, axis=-1, keepdims=True) * inv_s

    # ---- packed (TB, 8) output: 16x less writeback than a (TB,128) slab ----
    lane = jax.lax.broadcasted_iota(jnp.int32, (head.shape[0], OUT_W), 1)
    out = jnp.where(lane == 0, value, 0.0)
    out = jnp.where(lane == 1, action.astype(jnp.float32), out)
    out = jnp.where(lane == 2, alp, out)
    out = jnp.where(lane == 3, ent, out)
    out_ref[...] = out


def pack_params(params, d_in, hidden, n_actions, width=LANE,
                mxu_dtype=jnp.bfloat16):
    """Pack the 12 Linear params into 4 fused slabs (done once, host-side).

    Tower weights are stored in `mxu_dtype` (bf16 by default: native MXU rate on
    v6e/v7x, legal on v5e); the head weights and all biases stay f32.
    """
    assert 2 * hidden <= width and n_actions < VALUE_LANE

    w1 = jnp.zeros((d_in, width), jnp.float32)
    w1 = w1.at[:, :hidden].set(params["aw1"])
    w1 = w1.at[:, hidden:2 * hidden].set(params["cw1"])

    w2 = jnp.zeros((width, width), jnp.float32)
    w2 = w2.at[:hidden, :hidden].set(params["aw2"])
    w2 = w2.at[hidden:2 * hidden, hidden:2 * hidden].set(params["cw2"])

    wh = jnp.zeros((width, width), jnp.float32)
    wh = wh.at[:hidden, :n_actions].set(params["dw"])
    wh = wh.at[hidden:2 * hidden, VALUE_LANE].set(params["vw"][:, 0])

    b = jnp.zeros((8, width), jnp.float32)
    b = b.at[0, :hidden].set(params["ab1"][0])
    b = b.at[0, hidden:2 * hidden].set(params["cb1"][0])
    b = b.at[1, :hidden].set(params["ab2"][0])
    b = b.at[1, hidden:2 * hidden].set(params["cb2"][0])
    b = b.at[2, :n_actions].set(params["db"][0])
    b = b.at[2, VALUE_LANE].set(params["vb"][0, 0])

    return {"w1": w1.astype(mxu_dtype), "w2": w2.astype(mxu_dtype),
            "wh": wh, "b": b}


def policy_act(x, packed, n_actions):
    """Policy.act(inputs, states, masks, deterministic=True) hot path."""
    B, d_in = x.shape

    # Batch tiling: f32, sublane multiple of 8; weights stay VMEM-resident while
    # x/out tiles stream through the auto double-buffered pipeline.
    TB = min(512, _round_up(B, 8))
    B_pad = _round_up(B, TB)
    if B_pad != B:
        # tail padding only; padded rows are sliced off and excluded from the mean
        x = jnp.zeros((B_pad, d_in), x.dtype).at[:B].set(x)

    out = pl.pallas_call(
        functools.partial(policy_act_kernel, n_actions=n_actions),
        out_shape=jax.ShapeDtypeStruct((B_pad, OUT_W), jnp.float32),
        grid=(B_pad // TB,),
        in_specs=[
            pl.BlockSpec((TB, d_in), lambda i: (i, 0)),        # streamed observations
            pl.BlockSpec((d_in, LANE), lambda i: (0, 0)),      # resident weights
            pl.BlockSpec((LANE, LANE), lambda i: (0, 0)),
            pl.BlockSpec((LANE, LANE), lambda i: (0, 0)),
            pl.BlockSpec((8, LANE), lambda i: (0, 0)),
        ],
        out_specs=pl.BlockSpec((TB, OUT_W), lambda i: (i, 0)),
        compiler_params=pltpu.CompilerParams(
            dimension_semantics=("parallel",),       # shards batch tiles across TCs (v7x)
            vmem_limit_bytes=32 * 1024 * 1024,       # portable to v7x's smaller VMEM
        ),
    )(x, packed["w1"], packed["w2"], packed["wh"], packed["b"])

    # NOTE: at tiny B these slices are pure fixed overhead comparable to the launch.
    value = out[:B, 0:1]
    action = out[:B, 1:2].astype(jnp.int32)
    action_log_probs = out[:B, 2:3]
    dist_entropy = jnp.mean(out[:B, 3])              # true-B mean (padding excluded)
    return value, action, action_log_probs, dist_entropy


def make_params(key, d_in, hidden, n_actions):
    """Deterministic synthetic parameters; PyTorch Linear weights stored as (in, out)."""
    ks = jax.random.split(key, 6)

    def lin(k, fan_in, fan_out, scale=None):
        scale = scale if scale is not None else 1.0 / jnp.sqrt(fan_in)
        w = jax.random.normal(k, (fan_in, fan_out), jnp.float32) * scale
        b = jnp.zeros((1, fan_out), jnp.float32)
        return w, b

    aw1, ab1 = lin(ks[0], d_in, hidden)
    aw2, ab2 = lin(ks[1], hidden, hidden)
    cw1, cb1 = lin(ks[2], d_in, hidden)
    cw2, cb2 = lin(ks[3], hidden, hidden)
    vw, vb = lin(ks[4], hidden, 1)
    dw, db = lin(ks[5], hidden, n_actions, scale=0.01)
    return dict(aw1=aw1, ab1=ab1, aw2=aw2, ab2=ab2,
                cw1=cw1, cb1=cb1, cw2=cw2, cb2=cb2,
                vw=vw, vb=vb, dw=dw, db=db)


def policy_act_ref(x, p):
    """Pure-JAX (highest precision) reference of the same deterministic act() path."""
    hp = jax.lax.Precision.HIGHEST
    h = jnp.tanh(jnp.dot(x, p["aw1"], precision=hp) + p["ab1"])
    actor_h = jnp.tanh(jnp.dot(h, p["aw2"], precision=hp) + p["ab2"])
    g = jnp.tanh(jnp.dot(x, p["cw1"], precision=hp) + p["cb1"])
    critic_h = jnp.tanh(jnp.dot(g, p["cw2"], precision=hp) + p["cb2"])
    value = jnp.dot(critic_h, p["vw"], precision=hp) + p["vb"]
    logits = jnp.dot(actor_h, p["dw"], precision=hp) + p["db"]
    logp = jax.nn.log_softmax(logits, axis=-1)
    probs = jnp.exp(logp)
    action = jnp.argmax(logits, axis=-1, keepdims=True).astype(jnp.int32)
    alp = jnp.take_along_axis(logp, action, axis=-1)
    ent = (-jnp.sum(probs * logp, axis=-1)).mean()
    return value, action, alp, ent, logits


if __name__ == "__main__":
    B, D_IN, HIDDEN, N_ACTIONS = 8, 32, 64, 6

    key = jax.random.PRNGKey(0)
    kx, kp = jax.random.split(key)
    x = jax.random.normal(kx, (B, D_IN), jnp.float32)      # observations
    states = jnp.zeros((B, 1), jnp.float32)                 # MLPBase.state_size == 1
    masks = jnp.ones((B, 1), jnp.float32)                   # unused by non-recurrent base
    params = make_params(kp, D_IN, HIDDEN, N_ACTIONS)
    packed = pack_params(params, D_IN, HIDDEN, N_ACTIONS)   # one-time host-side packing

    value, action, action_log_probs, dist_entropy = policy_act(x, packed, N_ACTIONS)
    jax.block_until_ready((value, action, action_log_probs, dist_entropy))
    _ = (states, masks)   # states pass through unchanged (as in MLPBase.forward)

    # correctness check against the pure-JAX reference (bf16 MXU -> relaxed tolerances)
    rv, ra, rlp, re, rlogits = policy_act_ref(x, params)
    assert value.shape == (B, 1) and action.shape == (B, 1)
    assert action_log_probs.shape == (B, 1) and dist_entropy.shape == ()

    match = action == ra
    if not bool(jnp.all(match)):
        # bf16 tower matmuls may only flip argmax on numerically tied logits
        srt = jnp.sort(rlogits, axis=-1)
        gap = (srt[:, -1] - srt[:, -2])[:, None]
        assert bool(jnp.all(match | (gap < 1e-3))), "argmax mismatch on non-tied logits"
    assert jnp.allclose(value, rv, atol=5e-2, rtol=5e-2)
    assert jnp.allclose(action_log_probs, rlp, atol=5e-2, rtol=5e-2)
    assert jnp.allclose(dist_entropy, re, atol=5e-2, rtol=5e-2)
    print("KERNEL_OK")
</pallas_src>

<mosaic_0001>
module attributes {stable_mosaic.version = 11 : i64} {
  func.func @policy_act_kernel(%arg0: i32, %arg1: memref<8x32xf32, #tpu.memory_space<vmem>>, %arg2: memref<32x128xbf16, #tpu.memory_space<vmem>>, %arg3: memref<128x128xbf16, #tpu.memory_space<vmem>>, %arg4: memref<128x128xf32, #tpu.memory_space<vmem>>, %arg5: memref<8x128xf32, #tpu.memory_space<vmem>>, %arg6: memref<8x8xf32, #tpu.memory_space<vmem>>) attributes {dimension_semantics = [#tpu.dimension_semantics<parallel>], iteration_bounds = array<i64: 1>, scalar_prefetch = 0 : i64, scratch_operands = 0 : i64, tpu.core_type = #tpu.core_type<tc>, window_params = [{transform_indices = @transform_0, window_bounds = array<i64: 8, 32>}, {pipeline_mode = #tpu.pipeline_mode<synchronous>, transform_indices = @transform_1, window_bounds = array<i64: 32, 128>}, {pipeline_mode = #tpu.pipeline_mode<synchronous>, transform_indices = @transform_2, window_bounds = array<i64: 128, 128>}, {pipeline_mode = #tpu.pipeline_mode<synchronous>, transform_indices = @transform_3, window_bounds = array<i64: 128, 128>}, {pipeline_mode = #tpu.pipeline_mode<synchronous>, transform_indices = @transform_4, window_bounds = array<i64: 8, 128>}, {transform_indices = @transform_5, window_bounds = array<i64: 8, 8>}]} {
    %c0 = arith.constant 0 : index
    %c0_0 = arith.constant 0 : index
    %0 = vector.load %arg1[%c0, %c0_0] : memref<8x32xf32, #tpu.memory_space<vmem>>, vector<8x32xf32>
    %1 = arith.truncf %0 : vector<8x32xf32> to vector<8x32xbf16>
    %c0_1 = arith.constant 0 : index
    %c0_2 = arith.constant 0 : index
    %2 = vector.load %arg5[%c0_1, %c0_2] : memref<8x128xf32, #tpu.memory_space<vmem>>, vector<8x128xf32>
    %c0_3 = arith.constant 0 : index
    %c0_4 = arith.constant 0 : index
    %3 = vector.load %arg2[%c0_3, %c0_4] : memref<32x128xbf16, #tpu.memory_space<vmem>>, vector<32x128xbf16>
    %cst = arith.constant dense<0.000000e+00> : vector<8x128xf32>
    %4 = tpu.matmul %1, %3, %cst {dimension_numbers = #tpu.dot_dimension_numbers<[1], [0], [0], [1], [0, 0, 1, 1], [], []>} : vector<8x32xbf16>, vector<32x128xbf16>, vector<8x128xf32> -> vector<8x128xf32>
    %5 = vector.extract_strided_slice %2 {offsets = [0, 0], sizes = [1, 128], strides = [1, 1]} : vector<8x128xf32> to vector<1x128xf32>
    %6 = vector.broadcast %5 : vector<1x128xf32> to vector<8x128xf32>
    %7 = arith.addf %4, %6 : vector<8x128xf32>
    %8 = math.tanh %7 : vector<8x128xf32>
    %9 = arith.truncf %8 : vector<8x128xf32> to vector<8x128xbf16>
    %c0_5 = arith.constant 0 : index
    %c0_6 = arith.constant 0 : index
    %10 = vector.load %arg3[%c0_5, %c0_6] : memref<128x128xbf16, #tpu.memory_space<vmem>>, vector<128x128xbf16>
    %cst_7 = arith.constant dense<0.000000e+00> : vector<8x128xf32>
    %11 = tpu.matmul %9, %10, %cst_7 {dimension_numbers = #tpu.dot_dimension_numbers<[1], [0], [0], [1], [0, 0, 1, 1], [], []>} : vector<8x128xbf16>, vector<128x128xbf16>, vector<8x128xf32> -> vector<8x128xf32>
    %12 = vector.extract_strided_slice %2 {offsets = [1, 0], sizes = [1, 128], strides = [1, 1]} : vector<8x128xf32> to vector<1x128xf32>
    %13 = vector.broadcast %12 : vector<1x128xf32> to vector<8x128xf32>
    %14 = arith.addf %11, %13 : vector<8x128xf32>
    %15 = math.tanh %14 : vector<8x128xf32>
    %c0_8 = arith.constant 0 : index
    %c0_9 = arith.constant 0 : index
    %16 = vector.load %arg4[%c0_8, %c0_9] : memref<128x128xf32, #tpu.memory_space<vmem>>, vector<128x128xf32>
    %cst_10 = arith.constant dense<0.000000e+00> : vector<8x128xf32>
    %17 = tpu.matmul %15, %16, %cst_10 {dimension_numbers = #tpu.dot_dimension_numbers<[1], [0], [0], [1], [0, 0, 1, 1], [], []>} : vector<8x128xf32>, vector<128x128xf32>, vector<8x128xf32> -> vector<8x128xf32>
    %18 = vector.extract_strided_slice %2 {offsets = [2, 0], sizes = [1, 128], strides = [1, 1]} : vector<8x128xf32> to vector<1x128xf32>
    %19 = vector.broadcast %18 : vector<1x128xf32> to vector<8x128xf32>
    %20 = arith.addf %17, %19 : vector<8x128xf32>
    %21 = tpu.iota {dimensions = array<i32: 1>} : vector<8x128xi32>
    %c6_i32 = arith.constant 6 : i32
    %22 = vector.broadcast %c6_i32 : i32 to vector<8x128xi32>
    %23 = arith.cmpi slt, %21, %22 : vector<8x128xi32>
    %24 = vector.extract_strided_slice %20 {offsets = [0, 127], sizes = [8, 1], strides = [1, 1]} : vector<8x128xf32> to vector<8x1xf32>
    %cst_11 = arith.constant 0xFF800000 : f32
    %25 = vector.broadcast %cst_11 : f32 to vector<8x128xf32>
    %26 = arith.select %23, %20, %25 : vector<8x128xi1>, vector<8x128xf32>
    %cst_12 = arith.constant dense<0xFF800000> : vector<8xf32>
    %27 = vector.multi_reduction <maximumf>, %26, %cst_12 [1] : vector<8x128xf32> to vector<8xf32>
    %28 = vector.shape_cast %27 : vector<8xf32> to vector<8x1xf32>
    %29 = vector.broadcast %28 : vector<8x1xf32> to vector<8x128xf32>
    %30 = arith.subf %20, %29 : vector<8x128xf32>
    %cst_13 = arith.constant 0.000000e+00 : f32
    %31 = vector.broadcast %cst_13 : f32 to vector<8x128xf32>
    %32 = arith.select %23, %30, %31 : vector<8x128xi1>, vector<8x128xf32>
    %33 = math.exp %32 : vector<8x128xf32>
    %cst_14 = arith.constant 0.000000e+00 : f32
    %34 = vector.broadcast %cst_14 : f32 to vector<8x128xf32>
    %35 = arith.select %23, %33, %34 : vector<8x128xi1>, vector<8x128xf32>
    %cst_15 = arith.constant dense<0.000000e+00> : vector<8xf32>
    %36 = vector.multi_reduction <add>, %35, %cst_15 [1] : vector<8x128xf32> to vector<8xf32>
    %37 = vector.shape_cast %36 : vector<8xf32> to vector<8x1xf32>
    %38 = math.log %37 : vector<8x1xf32>
    %39 = tpu.reciprocal %37 {approx = true} : vector<8x1xf32> -> vector<8x1xf32>
    %40 = vector.broadcast %28 : vector<8x1xf32> to vector<8x128xf32>
    %41 = arith.cmpf oeq, %20, %40 : vector<8x128xf32>
    %42 = arith.andi %23, %41 : vector<8x128xi1>
    %c1073741824_i32 = arith.constant 1073741824 : i32
    %43 = vector.broadcast %c1073741824_i32 : i32 to vector<8x128xi32>
    %44 = arith.select %42, %21, %43 : vector<8x128xi1>, vector<8x128xi32>
    %cst_16 = arith.constant dense<2147483647> : vector<8xi32>
    %45 = vector.multi_reduction <minsi>, %44, %cst_16 [1] : vector<8x128xi32> to vector<8xi32>
    %46 = vector.shape_cast %45 : vector<8xi32> to vector<8x1xi32>
    %47 = vector.broadcast %46 : vector<8x1xi32> to vector<8x128xi32>
    %48 = arith.cmpi eq, %21, %47 : vector<8x128xi32>
    %cst_17 = arith.constant 0.000000e+00 : f32
    %49 = vector.broadcast %cst_17 : f32 to vector<8x128xf32>
    %50 = arith.select %48, %32, %49 : vector<8x128xi1>, vector<8x128xf32>
    %cst_18 = arith.constant dense<0.000000e+00> : vector<8xf32>
    %51 = vector.multi_reduction <add>, %50, %cst_18 [1] : vector<8x128xf32> to vector<8xf32>
    %52 = vector.shape_cast %51 : vector<8xf32> to vector<8x1xf32>
    %53 = arith.subf %52, %38 : vector<8x1xf32>
    %54 = arith.mulf %35, %32 : vector<8x128xf32>
    %cst_19 = arith.constant dense<0.000000e+00> : vector<8xf32>
    %55 = vector.multi_reduction <add>, %54, %cst_19 [1] : vector<8x128xf32> to vector<8xf32>
    %56 = vector.shape_cast %55 : vector<8xf32> to vector<8x1xf32>
    %57 = arith.mulf %56, %39 : vector<8x1xf32>
    %58 = arith.subf %38, %57 : vector<8x1xf32>
    %59 = tpu.iota {dimensions = array<i32: 1>} : vector<8x8xi32>
    %c0_i32 = arith.constant 0 : i32
    %60 = vector.broadcast %c0_i32 : i32 to vector<8x8xi32>
    %61 = arith.cmpi eq, %59, %60 : vector<8x8xi32>
    %cst_20 = arith.constant 0.000000e+00 : f32
    %62 = vector.shape_cast %24 : vector<8x1xf32> to vector<8x1xf32>
    %63 = vector.broadcast %62 : vector<8x1xf32> to vector<8x8xf32>
    %64 = vector.broadcast %cst_20 : f32 to vector<8x8xf32>
    %65 = arith.select %61, %63, %64 : vector<8x8xi1>, vector<8x8xf32>
    %c1_i32 = arith.constant 1 : i32
    %66 = vector.broadcast %c1_i32 : i32 to vector<8x8xi32>
    %67 = arith.cmpi eq, %59, %66 : vector<8x8xi32>
    %68 = arith.sitofp %46 : vector<8x1xi32> to vector<8x1xf32>
    %69 = vector.shape_cast %68 : vector<8x1xf32> to vector<8x1xf32>
    %70 = vector.broadcast %69 : vector<8x1xf32> to vector<8x8xf32>
    %71 = arith.select %67, %70, %65 : vector<8x8xi1>, vector<8x8xf32>
    %c2_i32 = arith.constant 2 : i32
    %72 = vector.broadcast %c2_i32 : i32 to vector<8x8xi32>
    %73 = arith.cmpi eq, %59, %72 : vector<8x8xi32>
    %74 = vector.shape_cast %53 : vector<8x1xf32> to vector<8x1xf32>
    %75 = vector.broadcast %74 : vector<8x1xf32> to vector<8x8xf32>
    %76 = arith.select %73, %75, %71 : vector<8x8xi1>, vector<8x8xf32>
    %c3_i32 = arith.constant 3 : i32
    %77 = vector.broadcast %c3_i32 : i32 to vector<8x8xi32>
    %78 = arith.cmpi eq, %59, %77 : vector<8x8xi32>
    %79 = vector.shape_cast %58 : vector<8x1xf32> to vector<8x1xf32>
    %80 = vector.broadcast %79 : vector<8x1xf32> to vector<8x8xf32>
    %81 = arith.select %78, %80, %76 : vector<8x8xi1>, vector<8x8xf32>
    %c0_21 = arith.constant 0 : index
    %c0_22 = arith.constant 0 : index
    %82 = vector.load %arg6[%c0_21, %c0_22] : memref<8x8xf32, #tpu.memory_space<vmem>>, vector<8x8xf32>
    tpu.vector_store %arg6[%c0_21, %c0_22], %81 {strides = array<i32>} : memref<8x8xf32, #tpu.memory_space<vmem>>, vector<8x8xf32>,
    return
  }
  func.func @transform_0(%arg0: i32) -> (i32, i32) {
    %c0_i32 = arith.constant 0 : i32
    %c0_i32_0 = arith.constant 0 : i32
    return %arg0, %c0_i32 : i32, i32
  }
  func.func @transform_1(%arg0: i32) -> (i32, i32) {
    %c0_i32 = arith.constant 0 : i32
    %c0_i32_0 = arith.constant 0 : i32
    %c0_i32_1 = arith.constant 0 : i32
    return %c0_i32, %c0_i32_0 : i32, i32
  }
  func.func @transform_2(%arg0: i32) -> (i32, i32) {
    %c0_i32 = arith.constant 0 : i32
    %c0_i32_0 = arith.constant 0 : i32
    %c0_i32_1 = arith.constant 0 : i32
    return %c0_i32, %c0_i32_0 : i32, i32
  }
  func.func @transform_3(%arg0: i32) -> (i32, i32) {
    %c0_i32 = arith.constant 0 : i32
    %c0_i32_0 = arith.constant 0 : i32
    %c0_i32_1 = arith.constant 0 : i32
    return %c0_i32, %c0_i32_0 : i32, i32
  }
  func.func @transform_4(%arg0: i32) -> (i32, i32) {
    %c0_i32 = arith.constant 0 : i32
    %c0_i32_0 = arith.constant 0 : i32
    %c0_i32_1 = arith.constant 0 : i32
    return %c0_i32, %c0_i32_0 : i32, i32
  }
  func.func @transform_5(%arg0: i32) -> (i32, i32) {
    %c0_i32 = arith.constant 0 : i32
    %c0_i32_0 = arith.constant 0 : i32
    return %arg0, %c0_i32 : i32, i32
  }
}

</mosaic_0001>

<llo_original>
// kernel: tpu_custom_call.1
$region0: #{tpu_custom_call.1}
  #allocation0 [shape = 'u32[]', space=smem, size = 0x4, offset = 0x4, fixed_abs, tag = 'smem constant byte address 0x4 - core index']
  #allocation1 [shape = 'u32[144,128]{1,0:T(1,128)}', space=vmem, size = 0x12000, scoped, tag = 'internal scratch']
  %s0 = inlined_call_operand.hbm [shape: f32[8,32], index: 0, kind: input, shape index: {}]
  %s1 = inlined_call_operand.hbm [shape: bf16[32,128], index: 1, kind: input, shape index: {}]
  %s2 = inlined_call_operand.hbm [shape: bf16[128,128], index: 2, kind: input, shape index: {}]
  %s3 = inlined_call_operand.hbm [shape: f32[128,128], index: 3, kind: input, shape index: {}]
  %s4 = inlined_call_operand.vmem [shape: f32[8,128], index: 4, kind: input, shape index: {}]
  %s5 = inlined_call_operand.hbm [shape: f32[8,8], index: 5, kind: output, shape index: {}]
  %s6 = sld [smem:[#allocation0]]
  $region46: #{tpu_custom_call.1} parent=0
    _
  %s8 = ssub.s32 1, %s6
  %s9 = scalar_select 0, %s8, %s6
  $region1: #{tpu_custom_call.1} parent=0
    #allocation2 [shape = 'u8[4096]{0}', space=vmem, size = 0x1000, scoped, tag = 'input window, operand 0, single buffered']
    #allocation3 [shape = 's32[1]{0}', space=sflag, size = 0x4, scoped, tag = 'scoped memory for tpu_custom_call.1']
    #allocation4 [shape = 's32[1]{0}', space=sflag, size = 0x4, scoped, tag = 'scoped memory for tpu_custom_call.1']
    #allocation5 [shape = 'u8[8192]{0}', space=vmem, size = 0x2000, scoped, tag = 'input window, operand 1, single buffered']
    #allocation6 [shape = 's32[1]{0}', space=sflag, size = 0x4, scoped, tag = 'scoped memory for tpu_custom_call.1']
    #allocation7 [shape = 'u8[32768]{0}', space=vmem, size = 0x8000, scoped, tag = 'input window, operand 2, single buffered']
    #allocation8 [shape = 'u8[65536]{0}', space=vmem, size = 0x10000, scoped, tag = 'input window, operand 3, single buffered']
    #allocation9 [shape = 's32[1]{0}', space=sflag, size = 0x4, scoped, tag = 'scoped memory for tpu_custom_call.1']
    #allocation10 [shape = 'u8[4096]{0}', space=vmem, size = 0x1000, scoped, tag = 'output window, operand 0, single buffered']
    %10 = vsyncpa [#allocation3], 0
    %11 = vsyncpa [#allocation6], 0
    %12 = vsyncpa [#allocation9], 0
    %13 = vsyncpa [#allocation4], 0
    // Predicated region
    $region2: #{tpu_custom_call.1} parent=1 // pred_check
      _
    $region3: #{tpu_custom_call.1} parent=1 // pred_check_branch
      %15 = sbr.rel (0) target = $region5
    $region4: #{tpu_custom_call.1} parent=1 // pred_region
      %s17 = ssub.s32 128, 128
      %18 = vsyncadd [#allocation3], %s17
      %s20 = sshll.u32 [#allocation2], 4
      %s21 = int_to_ptr.vmem [resolvable:$true] %s20
      %23 = dma.hbm_to_vmem [thread:$0]  %s0, 128, %s21, [#allocation3]
    $region5: #{tpu_custom_call.1} parent=1 // pred_fallthru
      _
    // Predicated region
    $region6: #{tpu_custom_call.1} parent=1 // pred_check
      _
    $region7: #{tpu_custom_call.1} parent=1 // pred_check_branch
      %25 = sbr.rel (0) target = $region9
    $region8: #{tpu_custom_call.1} parent=1 // pred_region
      %s27 = ssub.s32 256, 256
      %28 = vsyncadd [#allocation6], %s27
      %s29 = sshll.u32 [#allocation5], 4
      %s30 = int_to_ptr.vmem [resolvable:$true] %s29
      %35 = dma.hbm_to_vmem [thread:$0]  %s1, 256, %s30, [#allocation6], 64, 64, 4
    $region9: #{tpu_custom_call.1} parent=1 // pred_fallthru
      _
    // Predicated region
    $region10: #{tpu_custom_call.1} parent=1 // pred_check
      _
    $region11: #{tpu_custom_call.1} parent=1 // pred_check_branch
      %37 = sbr.rel (0) target = $region13
    $region12: #{tpu_custom_call.1} parent=1 // pred_region
      %s39 = ssub.s32 1024, 1024
      %40 = vsyncadd [#allocation6], %s39
      %s41 = sshll.u32 [#allocation7], 4
      %s42 = int_to_ptr.vmem [resolvable:$true] %s41
      %47 = dma.hbm_to_vmem [thread:$0]  %s2, 1024, %s42, [#allocation6], 64, 64, 4
    $region13: #{tpu_custom_call.1} parent=1 // pred_fallthru
      _
    // Predicated region
    $region14: #{tpu_custom_call.1} parent=1 // pred_check
      _
    $region15: #{tpu_custom_call.1} parent=1 // pred_check_branch
      %49 = sbr.rel (0) target = $region17
    $region16: #{tpu_custom_call.1} parent=1 // pred_region
      %s51 = ssub.s32 2048, 2048
      %52 = vsyncadd [#allocation9], %s51
      %s53 = sshll.u32 [#allocation8], 4
      %s54 = int_to_ptr.vmem [resolvable:$true] %s53
      %59 = dma.hbm_to_vmem [thread:$0]  %s3, 2048, %s54, [#allocation9], 128, 128, 8
    $region17: #{tpu_custom_call.1} parent=1 // pred_fallthru
      _
    // Predicated region
    $region18: #{tpu_custom_call.1} parent=1 // pred_check
      _
    $region19: #{tpu_custom_call.1} parent=1 // pred_check_branch
      %61 = sbr.rel (0) target = $region21
    $region20: #{tpu_custom_call.1} parent=1 // pred_region
      _
    $region21: #{tpu_custom_call.1} parent=1 // pred_fallthru
      _
    // Predicated region
    $region22: #{tpu_custom_call.1} parent=1 // pred_check
      _
    $region23: #{tpu_custom_call.1} parent=1 // pred_check_branch
      %63 = sbr.rel (0) target = $region25
    $region24: #{tpu_custom_call.1} parent=1 // pred_region
      %64 = dma.done [#allocation3], 128
    $region25: #{tpu_custom_call.1} parent=1 // pred_fallthru
      _
    // Predicated region
    $region26: #{tpu_custom_call.1} parent=1 // pred_check
      _
    $region27: #{tpu_custom_call.1} parent=1 // pred_check_branch
      %66 = sbr.rel (0) target = $region29
    $region28: #{tpu_custom_call.1} parent=1 // pred_region
      %67 = dma.done [#allocation6], 256
    $region29: #{tpu_custom_call.1} parent=1 // pred_fallthru
      _
    // Predicated region
    $region30: #{tpu_custom_call.1} parent=1 // pred_check
      _
    $region31: #{tpu_custom_call.1} parent=1 // pred_check_branch
      %69 = sbr.rel (0) target = $region33
    $region32: #{tpu_custom_call.1} parent=1 // pred_region
      %70 = dma.done [#allocation6], 1024
    $region33: #{tpu_custom_call.1} parent=1 // pred_fallthru
      _
    // Predicated region
    $region34: #{tpu_custom_call.1} parent=1 // pred_check
      _
    $region35: #{tpu_custom_call.1} parent=1 // pred_check_branch
      %72 = sbr.rel (0) target = $region37
    $region36: #{tpu_custom_call.1} parent=1 // pred_region
      %73 = dma.done [#allocation9], 2048
    $region37: #{tpu_custom_call.1} parent=1 // pred_fallthru
      _
    %v75 = vld [vmem:[#allocation2] sm:$0xff]
    %v76 = vpack.c.bf16 %v75, %v75
    %v77 = vld [vmem:[%s4] sm:$0xff]
    %v78 = vld [vmem:[#allocation5] sm:$0xf]
    %v79 = vld [vmem:[#allocation5 + $0x4] sm:$0xf]
    %v80 = vld [vmem:[#allocation5 + $0x8] sm:$0xf]
    %v81 = vld [vmem:[#allocation5 + $0xc] sm:$0xf]
    %v82 = vlaneseq
    %v83 = vshrl.u32 %v82, 7
    %v84 = vsub.s32 0, %v83
    %v85 = vrot.slane %v77, %v84
    %v90 = vunpack.c.l.b16 %v78
    %v91 = vunpack.c.l.b16 %v79
    %v92 = vunpack.c.l.b16 %v80
    %v93 = vunpack.c.l.b16 %v81
    %v94 = vpack.c.b16 %v91, %v90
    %v95 = vpack.c.b16 %v93, %v92
    %vm98 = vcmask 261120
    %v100 = vsel %vm98, %v76, 0
    %102 = vmatprep.subr.bf16.mxu0 0
    %103 = vmatpush1.bf16.msra.mxu0 %v94
    %104 = vmatprep.subr.bf16.mxu0 0
    %105 = vmatpush1.bf16.msra.mxu0 %v95
    %106 = vmatprep.subr.bf16.mxu0 0
    %107 = vmatpush1.bf16.msra.mxu0 0
    %108 = vmatprep.subr.bf16.mxu0 0
    %109 = vmatpush1.bf16.msra.mxu0 0
    %110 = vmatprep.subr.bf16.mxu0 0
    %111 = vmatpush1.bf16.msra.mxu0 0
    %112 = vmatprep.subr.bf16.mxu0 0
    %113 = vmatpush1.bf16.msra.mxu0 0
    %114 = vmatprep.subr.bf16.mxu0 0
    %115 = vmatpush1.bf16.msra.mxu0 0
    %116 = vmatprep.subr.bf16.mxu0 0
    %117 = vmatpush1.bf16.msra.mxu0 0
    %118 = vmatprep.subr.bf16.mxu0 0
    %119 = vmatpush1.bf16.msra.mxu0 0
    %120 = vmatprep.subr.bf16.mxu0 0
    %121 = vmatpush1.bf16.msra.mxu0 0
    %122 = vmatprep.subr.bf16.mxu0 0
    %123 = vmatpush1.bf16.msra.mxu0 0
    %124 = vmatprep.subr.bf16.mxu0 0
    %125 = vmatpush1.bf16.msra.mxu0 0
    %126 = vmatprep.subr.bf16.mxu0 0
    %127 = vmatpush1.bf16.msra.mxu0 0
    %128 = vmatprep.subr.bf16.mxu0 0
    %129 = vmatpush1.bf16.msra.mxu0 0
    %130 = vmatprep.subr.bf16.mxu0 0
    %131 = vmatpush1.bf16.msra.mxu0 0
    %132 = vmatprep.subr.bf16.mxu0 0
    %133 = vmatpush1.bf16.msra.mxu0 0
    %134 = vmatprep.mubr.bf16.mxu0 0
    %135 = vmatmul.mubr.bf16.gmra.mrb[0].mxu0 %v100
    %v136 = vpop.f32.mrb[0].mxu0
    %v137 = vadd.f32 %v85, %v136
    %v138 = vpop.f32.mrb[0].mxu0
    %v139 = vpop.f32.mrb[0].mxu0
    %v140 = vpop.f32.mrb[0].mxu0
    %141 = vdwg.mxu0
    %v142 = vtanh.pop %v137
    %v143 = vpack.c.bf16 %v142, %v142
    %v144 = vld [vmem:[#allocation7] sm:$0xf]
    %v145 = vld [vmem:[#allocation7 + $0x4] sm:$0xf]
    %v146 = vld [vmem:[#allocation7 + $0x8] sm:$0xf]
    %v147 = vld [vmem:[#allocation7 + $0xc] sm:$0xf]
    %v148 = vld [vmem:[#allocation7 + $0x10] sm:$0xf]
    %v149 = vld [vmem:[#allocation7 + $0x14] sm:$0xf]
    %v150 = vld [vmem:[#allocation7 + $0x18] sm:$0xf]
    %v151 = vld [vmem:[#allocation7 + $0x1c] sm:$0xf]
    %v152 = vld [vmem:[#allocation7 + $0x20] sm:$0xf]
    %v153 = vld [vmem:[#allocation7 + $0x24] sm:$0xf]
    %v154 = vld [vmem:[#allocation7 + $0x28] sm:$0xf]
    %v155 = vld [vmem:[#allocation7 + $0x2c] sm:$0xf]
    %v156 = vld [vmem:[#allocation7 + $0x30] sm:$0xf]
    %v157 = vld [vmem:[#allocation7 + $0x34] sm:$0xf]
    %v158 = vld [vmem:[#allocation7 + $0x38] sm:$0xf]
    %v159 = vld [vmem:[#allocation7 + $0x3c] sm:$0xf]
    %v160 = vlaneseq
    %v161 = vshrl.u32 %v160, 7
    %v162 = vsub.s32 1, %v161
    %v163 = vrot.slane %v77, %v162
    %v180 = vunpack.c.l.b16 %v144
    %v181 = vunpack.c.l.b16 %v145
    %v182 = vunpack.c.l.b16 %v146
    %v183 = vunpack.c.l.b16 %v147
    %v184 = vunpack.c.l.b16 %v148
    %v185 = vunpack.c.l.b16 %v149
    %v186 = vunpack.c.l.b16 %v150
    %v187 = vunpack.c.l.b16 %v151
    %v188 = vunpack.c.l.b16 %v152
    %v189 = vunpack.c.l.b16 %v153
    %v190 = vunpack.c.l.b16 %v154
    %v191 = vunpack.c.l.b16 %v155
    %v192 = vunpack.c.l.b16 %v156
    %v193 = vunpack.c.l.b16 %v157
    %v194 = vunpack.c.l.b16 %v158
    %v195 = vunpack.c.l.b16 %v159
    %v196 = vpack.c.b16 %v181, %v180
    %v197 = vpack.c.b16 %v183, %v182
    %v198 = vpack.c.b16 %v185, %v184
    %v199 = vpack.c.b16 %v187, %v186
    %v200 = vpack.c.b16 %v189, %v188
    %v201 = vpack.c.b16 %v191, %v190
    %v202 = vpack.c.b16 %v193, %v192
    %v203 = vpack.c.b16 %v195, %v194
    %212 = vmatprep.subr.bf16.mxu0 0
    %213 = vmatpush1.bf16.msra.mxu0 %v196
    %214 = vmatprep.subr.bf16.mxu0 0
    %215 = vmatpush1.bf16.msra.mxu0 %v197
    %216 = vmatprep.subr.bf16.mxu0 0
    %217 = vmatpush1.bf16.msra.mxu0 %v198
    %218 = vmatprep.subr.bf16.mxu0 0
    %219 = vmatpush1.bf16.msra.mxu0 %v199
    %220 = vmatprep.subr.bf16.mxu0 0
    %221 = vmatpush1.bf16.msra.mxu0 %v200
    %222 = vmatprep.subr.bf16.mxu0 0
    %223 = vmatpush1.bf16.msra.mxu0 %v201
    %224 = vmatprep.subr.bf16.mxu0 0
    %225 = vmatpush1.bf16.msra.mxu0 %v202
    %226 = vmatprep.subr.bf16.mxu0 0
    %227 = vmatpush1.bf16.msra.mxu0 %v203
    %228 = vmatprep.subr.bf16.mxu0 0
    %229 = vmatpush1.bf16.msra.mxu0 0
    %230 = vmatprep.subr.bf16.mxu0 0
    %231 = vmatpush1.bf16.msra.mxu0 0
    %232 = vmatprep.subr.bf16.mxu0 0
    %233 = vmatpush1.bf16.msra.mxu0 0
    %234 = vmatprep.subr.bf16.mxu0 0
    %235 = vmatpush1.bf16.msra.mxu0 0
    %236 = vmatprep.subr.bf16.mxu0 0
    %237 = vmatpush1.bf16.msra.mxu0 0
    %238 = vmatprep.subr.bf16.mxu0 0
    %239 = vmatpush1.bf16.msra.mxu0 0
    %240 = vmatprep.subr.bf16.mxu0 0
    %241 = vmatpush1.bf16.msra.mxu0 0
    %242 = vmatprep.subr.bf16.mxu0 0
    %243 = vmatpush1.bf16.msra.mxu0 0
    %244 = vmatprep.mubr.bf16.mxu0 0
    %245 = vmatmul.mubr.bf16.gmra.mrb[0].mxu0 %v143
    %v246 = vpop.f32.mrb[0].mxu0
    %v247 = vadd.f32 %v163, %v246
    %v248 = vpop.f32.mrb[0].mxu0
    %v249 = vpop.f32.mrb[0].mxu0
    %v250 = vpop.f32.mrb[0].mxu0
    %251 = vdwg.mxu0
    %v252 = vtanh.pop %v247
    %v253 = vld [vmem:[#allocation8] sm:$0xff]
    %v254 = vld [vmem:[#allocation8 + $0x8] sm:$0xff]
    %v255 = vld [vmem:[#allocation8 + $0x10] sm:$0xff]
    %v256 = vld [vmem:[#allocation8 + $0x18] sm:$0xff]
    %v257 = vld [vmem:[#allocation8 + $0x20] sm:$0xff]
    %v258 = vld [vmem:[#allocation8 + $0x28] sm:$0xff]
    %v259 = vld [vmem:[#allocation8 + $0x30] sm:$0xff]
    %v260 = vld [vmem:[#allocation8 + $0x38] sm:$0xff]
    %v261 = vld [vmem:[#allocation8 + $0x40] sm:$0xff]
    %v262 = vld [vmem:[#allocation8 + $0x48] sm:$0xff]
    %v263 = vld [vmem:[#allocation8 + $0x50] sm:$0xff]
    %v264 = vld [vmem:[#allocation8 + $0x58] sm:$0xff]
    %v265 = vld [vmem:[#allocation8 + $0x60] sm:$0xff]
    %v266 = vld [vmem:[#allocation8 + $0x68] sm:$0xff]
    %v267 = vld [vmem:[#allocation8 + $0x70] sm:$0xff]
    %v268 = vld [vmem:[#allocation8 + $0x78] sm:$0xff]
    %v269 = vlaneseq
    %v270 = vshrl.u32 %v269, 7
    %v271 = vsub.s32 2, %v270
    %v272 = vrot.slane %v77, %v271
    %273 = vmatprep.subr.mxu0 0.0
    %274 = vmatpush1.msra.mxu0 %v253
    %275 = vmatprep.subr.mxu0 0.0
    %276 = vmatpush1.msra.mxu0 %v254
    %277 = vmatprep.subr.mxu0 0.0
    %278 = vmatpush1.msra.mxu0 %v255
    %279 = vmatprep.subr.mxu0 0.0
    %280 = vmatpush1.msra.mxu0 %v256
    %281 = vmatprep.subr.mxu0 0.0
    %282 = vmatpush1.msra.mxu0 %v257
    %283 = vmatprep.subr.mxu0 0.0
    %284 = vmatpush1.msra.mxu0 %v258
    %285 = vmatprep.subr.mxu0 0.0
    %286 = vmatpush1.msra.mxu0 %v259
    %287 = vmatprep.subr.mxu0 0.0
    %288 = vmatpush1.msra.mxu0 %v260
    %289 = vmatprep.subr.mxu0 0.0
    %290 = vmatpush1.msra.mxu0 %v261
    %291 = vmatprep.subr.mxu0 0.0
    %292 = vmatpush1.msra.mxu0 %v262
    %293 = vmatprep.subr.mxu0 0.0
    %294 = vmatpush1.msra.mxu0 %v263
    %295 = vmatprep.subr.mxu0 0.0
    %296 = vmatpush1.msra.mxu0 %v264
    %297 = vmatprep.subr.mxu0 0.0
    %298 = vmatpush1.msra.mxu0 %v265
    %299 = vmatprep.subr.mxu0 0.0
    %300 = vmatpush1.msra.mxu0 %v266
    %301 = vmatprep.subr.mxu0 0.0
    %302 = vmatpush1.msra.mxu0 %v267
    %303 = vmatprep.subr.mxu0 0.0
    %304 = vmatpush1.msra.mxu0 %v268
    %305 = vmatprep.subr.mxu0 0.0
    %306 = vmatpush1.msra.mxu0 0.0
    %307 = vmatprep.subr.mxu0 0.0
    %308 = vmatpush1.msra.mxu0 0.0
    %309 = vmatprep.subr.mxu0 0.0
    %310 = vmatpush1.msra.mxu0 0.0
    %311 = vmatprep.subr.mxu0 0.0
    %312 = vmatpush1.msra.mxu0 0.0
    %313 = vmatprep.subr.mxu0 0.0
    %314 = vmatpush1.msra.mxu0 0.0
    %315 = vmatprep.subr.mxu0 0.0
    %316 = vmatpush1.msra.mxu0 0.0
    %317 = vmatprep.subr.mxu0 0.0
    %318 = vmatpush1.msra.mxu0 0.0
    %319 = vmatprep.subr.mxu0 0.0
    %320 = vmatpush1.msra.mxu0 0.0
    %321 = vmatprep.subr.mxu0 0.0
    %322 = vmatpush1.msra.mxu0 0.0
    %323 = vmatprep.subr.mxu0 0.0
    %324 = vmatpush1.msra.mxu0 0.0
    %325 = vmatprep.subr.mxu0 0.0
    %326 = vmatpush1.msra.mxu0 0.0
    %327 = vmatprep.subr.mxu0 0.0
    %328 = vmatpush1.msra.mxu0 0.0
    %329 = vmatprep.subr.mxu0 0.0
    %330 = vmatpush1.msra.mxu0 0.0
    %331 = vmatprep.subr.mxu0 0.0
    %332 = vmatpush1.msra.mxu0 0.0
    %333 = vmatprep.subr.mxu0 0.0
    %334 = vmatpush1.msra.mxu0 0.0
    %335 = vmatprep.subr.mxu0 0.0
    %336 = vmatpush1.msra.mxu0 0.0
    %337 = vmatprep.mubr.f32.mxu0 0.0
    %338 = vmatmul.mubr.f32.gmra.mrb[0].mxu0 %v252
    %v339 = vpop.f32.mrb[0].mxu0
    %v340 = vadd.f32 %v272, %v339
    %v341 = vpop.f32.mrb[0].mxu0
    %342 = vdwg.mxu0
    %v343 = vlaneseq
    %v344 = vand.u32 %v343, 127
    %vm345 = vcmp.lt.s32.totalorder %v344, 6
    %v346 = vsel %vm345, %v340, -inf
    %347 = vmax.xlane.f32.xlu0 %v346
    %v348 = vpop.xlane.xlu0 %347
    %v349 = vsub.f32 %v340, %v348
    %v350 = vsel %vm345, %v349, 0.0
    %v351 = vmul.f32 %v350, 1.442695
    %v352 = vpow.pop %v351
    %v353 = vsel %vm345, %v352, 0.0
    %354 = vadd.xlane.f32.xlu0 %v353
    %v355 = vpop.xlane.xlu0 %354
    %v356 = vlog2.pop %v355
    %v357 = vmul.f32 %v356, 0.6931472
    %v358 = vrcp.pop %v355
    %vm359 = vcmp.eq.f32.partialorder %v340, %v348
    %vm360 = vmand %vm345, %vm359
    %v361 = vsel %vm360, %v344, 1073741824
    %v362 = vand.u32 %v361, 65535
    %v363 = vshra.s32 %v361, 16
    %v364 = vcvt.s32.f32 %v362
    %v365 = vcvt.s32.f32 %v363
    %366 = vmin.xlane.f32.xlu0 %v365
    %v367 = vpop.xlane.xlu0 %366
    %vm368 = vcmp.eq.f32.partialorder %v365, %v367
    %v369 = vsel %vm368, %v364, inf
    %370 = vmin.xlane.f32.xlu0 %v369
    %v371 = vpop.xlane.xlu0 %370
    %v372 = vcvt.f32.s32 %v371
    %v373 = vcvt.f32.s32 %v367
    %v374 = vshll.u32 %v373, 16
    %v375 = vadd.s32 %v374, %v372
    %vm376 = vcmp.eq.s32.totalorder %v344, %v375
    %v377 = vsel %vm376, %v350, 0.0
    %378 = vadd.xlane.f32.xlu0 %v377
    %v379 = vpop.xlane.xlu0 %378
    %v380 = vsub.f32 %v379, %v357
    %v381 = vmul.f32 %v353, %v350
    %382 = vadd.xlane.f32.xlu0 %v381
    %v383 = vpop.xlane.xlu0 %382
    %v384 = vmul.f32 %v383, %v358
    %v385 = vsub.f32 %v357, %v384
    %vm386 = vcmp.eq.s32.totalorder %v344, 0
    %388 = vset.pattern.permute.xlu0 127
    %389 = vperm.xlu0 %388, %v340
    %v390 = vpop.permute.xlu0 %389
    %v392 = vsel %vm386, %v390, 0.0
    %vm393 = vcmp.eq.s32.totalorder %v344, 1
    %v394 = vcvt.s32.f32 %v375
    %v395 = vsel %vm393, %v394, %v392
    %vm396 = vcmp.eq.s32.totalorder %v344, 2
    %v397 = vsel %vm396, %v380, %v395
    %vm398 = vcmp.eq.s32.totalorder %v344, 3
    %v399 = vsel %vm398, %v385, %v397
    %vm400 = vcmask 64512
    %401 = vst.msk [vmem:[#allocation10] sm:$0xff] %vm400, %v399
    // Predicated region
    $region38: #{tpu_custom_call.1} parent=1 // pred_check
      _
    $region39: #{tpu_custom_call.1} parent=1 // pred_check_branch
      %403 = sbr.rel (0) target = $region41
    $region40: #{tpu_custom_call.1} parent=1 // pred_region
      %s405 = ssub.s32 128, 128
      %406 = vsyncadd [#allocation4], %s405
      %s408 = sshll.u32 [#allocation10], 4
      %s409 = int_to_ptr.vmem [resolvable:$true] %s408
      %411 = dma.vmem_to_hbm [thread:$0]  %s409, 128, %s5, [#allocation4]
    $region41: #{tpu_custom_call.1} parent=1 // pred_fallthru
      _
    // Predicated region
    $region42: #{tpu_custom_call.1} parent=1 // pred_check
      _
    $region43: #{tpu_custom_call.1} parent=1 // pred_check_branch
      %413 = sbr.rel (0) target = $region45
    $region44: #{tpu_custom_call.1} parent=1 // pred_region
      %414 = dma.done [#allocation4], 128
    $region45: #{tpu_custom_call.1} parent=1 // pred_fallthru
      _
    %415 = vsyncpa [#allocation3], 1
    %416 = vsyncpa [#allocation6], 1
    %417 = vsyncpa [#allocation9], 1
    %418 = vsyncpa [#allocation4], 1

</llo_original>
